<compile_context>
chip_gen: v6e
topology: v6e:2x2x1
jax: 0.10.0
libtpu: 0.0.40
codegen_flags: <defaults>
</compile_context>

<pallas_src>
import functools

import jax
import jax.numpy as jnp
import numpy as np
from jax.experimental import pallas as pl
from jax.experimental.pallas import tpu as pltpu


def _round_up(a: int, b: int) -> int:
    return (a + b - 1) // b * b


def _cdiv(a: int, b: int) -> int:
    return (a + b - 1) // b


# ----------------------------- kernels ---------------------------------------

def _gabor_kernel_folded(x_ref, wmu_ref, o_ref):
    """f32 path. x_ref holds [x, ||x||^2, 1]; wmu_ref holds
       [[W^T | (gamma*mu)^T], [0 | -gamma/2], [b | -gamma/2*||mu||^2]].
       One MXU pass produces both the sin argument and the exp argument."""
    dp = o_ref.shape[-1]                                  # padded dim_out (mult of 128)
    fused = jnp.dot(x_ref[...], wmu_ref[...], preferred_element_type=jnp.float32)
    o_ref[...] = (jnp.sin(fused[:, :dp]) * jnp.exp(fused[:, dp:])).astype(o_ref.dtype)


def _gabor_kernel_consts(x_ref, wmu_ref, c_ref, o_ref):
    """bf16/f16 path. MXU operands stay in the activation dtype (fast MXU), but
       ||x||^2 and the exp-argument constants are kept in f32."""
    dp = o_ref.shape[-1]
    x = x_ref[...]
    fused = jnp.dot(x, wmu_ref[...], preferred_element_type=jnp.float32)  # (tm, 2*dp)
    xf = x.astype(jnp.float32)
    x_sq = jnp.sum(xf * xf, axis=-1, keepdims=True)       # (tm, 1) f32
    consts = c_ref[...]                                    # (3, dp) f32: [b; -g/2; -g/2*||mu||^2]
    lin = fused[:, :dp] + consts[0:1, :]                   # x @ W^T + b
    env = jnp.exp(consts[1:2, :] * x_sq + consts[2:3, :] + fused[:, dp:])
    o_ref[...] = (jnp.sin(lin) * env).astype(o_ref.dtype)


# ----------------------------- wrapper ----------------------------------------

@functools.partial(jax.jit, static_argnames=("row_tile",))
def gabor_layer(x, weight, bias, mu, gamma, *, row_tile=1024):
    """x: (..., dim_in) -> (..., dim_out)."""
    dim_out, dim_in = weight.shape
    lead_shape = x.shape[:-1]
    n = int(np.prod(lead_shape)) if lead_shape else 1
    out_dtype = x.dtype
    use_fold = jnp.dtype(x.dtype) == jnp.dtype(jnp.float32)

    # ---- constant folding (once, in the wrapper, not per grid step) ----------
    gamma_f = gamma.astype(jnp.float32)
    nhg = -0.5 * gamma_f                                            # (dim_out,)
    mu_f = mu.astype(jnp.float32)
    c = nhg * jnp.sum(mu_f * mu_f, axis=-1)                         # -0.5*gamma*||mu||^2

    # ---- lane-dense padding of the output dim to a multiple of 128 -----------
    dp = _round_up(dim_out, 128)
    pad_o = dp - dim_out
    wt_p = jnp.pad(weight.astype(jnp.float32).T, ((0, 0), (0, pad_o)))       # (dim_in, dp)
    mug_p = jnp.pad((mu_f * gamma_f[:, None]).T, ((0, 0), (0, pad_o)))       # (dim_in, dp)
    b_p = jnp.pad(bias.astype(jnp.float32), (0, pad_o))
    nhg_p = jnp.pad(nhg, (0, pad_o))
    c_p = jnp.pad(c, (0, pad_o))

    x2d = x.reshape(n, dim_in)
    if use_fold:
        # Fold ||x||^2 and all broadcast constants into the single MXU pass.
        k_dim = dim_in + 2
        x_sq = jnp.sum(x2d * x2d, axis=-1, keepdims=True)
        x_feed = jnp.concatenate([x2d, x_sq, jnp.ones_like(x_sq)], axis=-1)   # (n, k_dim)
        left = jnp.concatenate(
            [wt_p, jnp.zeros((1, dp), jnp.float32), b_p[None, :]], axis=0)    # (k_dim, dp)
        right = jnp.concatenate([mug_p, nhg_p[None, :], c_p[None, :]], axis=0)
        wmu = jnp.concatenate([left, right], axis=1)                          # (k_dim, 2*dp) f32
        kernel = _gabor_kernel_folded
        const_args = ()
        const_specs = []
    else:
        # bf16/f16 activations: keep exp-argument constants in f32 (one packed array).
        k_dim = dim_in
        x_feed = x2d
        wmu = jnp.concatenate([wt_p, mug_p], axis=1).astype(x.dtype)          # (k_dim, 2*dp)
        consts = jnp.stack([b_p, nhg_p, c_p], axis=0)                         # (3, dp) f32
        kernel = _gabor_kernel_consts
        const_args = (consts,)
        const_specs = [pl.BlockSpec((3, dp), lambda i: (0, 0),
                                    pipeline_mode=pl.Buffered(1))]

    x_isz = jnp.dtype(x_feed.dtype).itemsize
    w_isz = jnp.dtype(wmu.dtype).itemsize
    o_isz = jnp.dtype(out_dtype).itemsize

    # ---- row tiling: balanced tiles, >=2 (even) grid steps for v7x megacore --
    n_eff = max(n, 1)
    num_tiles = _cdiv(n_eff, row_tile)
    if n_eff > 8:
        num_tiles = max(num_tiles, 2)        # both v7x TensorCores get work
    if num_tiles > 1 and num_tiles % 2:
        num_tiles += 1                       # even step count balances the two cores
    while num_tiles > 2 and _cdiv(n_eff, num_tiles) < 256:
        num_tiles -= 2                       # don't under-fill the MXU M dimension
    tm = _round_up(_cdiv(n_eff, num_tiles), 8)

    # ---- per-generation VMEM budget (v7x: 64 MiB per TensorCore) -------------
    try:
        vmem_cap = int(pltpu.get_tpu_info().vmem_capacity_bytes)
    except Exception:
        vmem_cap = 64 * 2 ** 20              # conservative fallback (v7x-sized)
    budget = int(0.70 * vmem_cap)

    def _tile_vmem_bytes(tm_):
        return (2 * tm_ * k_dim * x_isz                  # x tile, double-buffered
                + 2 * tm_ * dp * o_isz                   # out tile, double-buffered
                + k_dim * 2 * dp * w_isz + 3 * dp * 4    # resident operands (1 buffer)
                + 6 * tm_ * dp * 4)                      # f32 matmul result + sin/exp temps

    while tm > 8 and _tile_vmem_bytes(tm) > budget:
        tm = max(8, _round_up(tm // 2, 8))
    num_tiles = _cdiv(n_eff, tm)
    if num_tiles > 1 and num_tiles % 2:
        num_tiles += 1
    n_pad = num_tiles * tm
    grid = (num_tiles,)

    if n_pad != n:
        x_feed = jnp.pad(x_feed, ((0, n_pad - n), (0, 0)))   # zero rows -> finite, sliced off

    vmem_limit = int(min(budget, max(32 * 2 ** 20, 2 * _tile_vmem_bytes(tm))))

    cost = pl.CostEstimate(
        flops=2 * n_pad * k_dim * 2 * dp,
        transcendentals=2 * n_pad * dp,                     # sin + exp per output element
        bytes_accessed=(n_pad * k_dim * x_isz + k_dim * 2 * dp * w_isz
                        + 3 * dp * 4 + n_pad * dp * o_isz))

    in_specs = [
        pl.BlockSpec((tm, k_dim), lambda i: (i, 0)),                         # x rows (pipelined)
        pl.BlockSpec((k_dim, 2 * dp), lambda i: (0, 0),
                     pipeline_mode=pl.Buffered(1)),                          # fused weights (resident)
    ] + const_specs

    out = pl.pallas_call(
        kernel,
        out_shape=jax.ShapeDtypeStruct((n_pad, dp), out_dtype),
        grid_spec=pltpu.PrefetchScalarGridSpec(
            num_scalar_prefetch=0,
            grid=grid,
            in_specs=in_specs,
            out_specs=pl.BlockSpec((tm, dp), lambda i: (i, 0)),              # lane-dense output
        ),
        compiler_params=pltpu.CompilerParams(
            dimension_semantics=("parallel",),
            vmem_limit_bytes=vmem_limit),
        cost_estimate=cost,
    )(x_feed, wmu, *const_args)

    out = out[:n, :dim_out]
    return out.reshape(*lead_shape, dim_out)


# ----------------------------- params / reference -----------------------------

def init_gabor_params(key, dim_in, dim_out, weight_scale, alpha=1.0, beta=1.0,
                      dtype=jnp.float32):
    """Deterministic re-implementation of GaborLayer.__init__ parameter init."""
    k_w, k_b, k_mu, k_g = jax.random.split(key, 4)
    # nn.Linear default init: U(-1/sqrt(dim_in), 1/sqrt(dim_in))
    bound = 1.0 / np.sqrt(dim_in)
    weight = jax.random.uniform(k_w, (dim_out, dim_in), dtype,
                                minval=-bound, maxval=bound)
    # mu ~ U(-1, 1)
    mu = 2.0 * jax.random.uniform(k_mu, (dim_out, dim_in), dtype) - 1.0
    # gamma ~ Gamma(alpha, rate=beta)
    gamma = jax.random.gamma(k_g, alpha, (dim_out,), dtype) / beta
    # weight *= weight_scale * sqrt(gamma)[:, None]
    weight = weight * (weight_scale * jnp.sqrt(gamma)[:, None])
    # bias ~ U(-pi, pi)
    bias = jax.random.uniform(k_b, (dim_out,), dtype, minval=-np.pi, maxval=np.pi)
    return weight, bias, mu, gamma


def _reference(x, weight, bias, mu, gamma):
    x32 = x.astype(jnp.float32)
    w32 = weight.astype(jnp.float32)
    mu32 = mu.astype(jnp.float32)
    g32 = gamma.astype(jnp.float32)
    b32 = bias.astype(jnp.float32)
    d = (jnp.sum(x32 ** 2, -1)[..., None]
         + jnp.sum(mu32 ** 2, -1)[None, :]
         - 2.0 * x32 @ mu32.T)
    return jnp.sin(x32 @ w32.T + b32) * jnp.exp(-0.5 * d * g32[None, :])


if __name__ == "__main__":
    key = jax.random.PRNGKey(0)
    dim_in, dim_out = 16, 32
    weight_scale = 2.0

    k_params, k_x1, k_x2, k_x3 = jax.random.split(key, 4)
    weight, bias, mu, gamma = init_gabor_params(
        k_params, dim_in, dim_out, weight_scale, alpha=1.0, beta=1.0)

    # Case 1: (batch=2, seq=8, dim_in=16) -- f32 folded path, 2-step grid.
    x1 = jax.random.normal(k_x1, (2, 8, dim_in), jnp.float32)
    out1 = jax.block_until_ready(gabor_layer(x1, weight, bias, mu, gamma))
    ref1 = _reference(x1.reshape(-1, dim_in), weight, bias, mu, gamma).reshape(2, 8, dim_out)
    np.testing.assert_allclose(np.asarray(out1), np.asarray(ref1), rtol=1e-5, atol=2e-5)

    # Case 2: non-divisible row count exercises the pad-and-slice path.
    x2 = jax.random.normal(k_x2, (3, 5, dim_in), jnp.float32)
    out2 = jax.block_until_ready(gabor_layer(x2, weight, bias, mu, gamma))
    ref2 = _reference(x2.reshape(-1, dim_in), weight, bias, mu, gamma).reshape(3, 5, dim_out)
    np.testing.assert_allclose(np.asarray(out2), np.asarray(ref2), rtol=1e-5, atol=2e-5)

    # Case 3: bf16 activations exercise the consts-kernel path (loose tolerance by
    # design: W and gamma*mu are bf16-rounded MXU operands; exp constants stay f32).
    x3 = (0.5 * jax.random.normal(k_x3, (2, 8, dim_in), jnp.float32)).astype(jnp.bfloat16)
    out3 = jax.block_until_ready(gabor_layer(x3, weight, bias, mu, gamma))
    ref3 = _reference(x3.reshape(-1, dim_in), weight, bias, mu, gamma).reshape(2, 8, dim_out)
    np.testing.assert_allclose(np.asarray(out3.astype(jnp.float32)), np.asarray(ref3),
                               rtol=5e-2, atol=8e-2)

    print("KERNEL_OK")
</pallas_src>

<mosaic_0001>
module attributes {stable_mosaic.version = 11 : i64} {
  func.func @_gabor_kernel_folded(%arg0: i32, %arg1: memref<8x18xf32, #tpu.memory_space<vmem>>, %arg2: memref<18x256xf32, #tpu.memory_space<vmem>>, %arg3: memref<8x128xf32, #tpu.memory_space<vmem>>) attributes {dimension_semantics = [#tpu.dimension_semantics<parallel>], iteration_bounds = array<i64: 2>, scalar_prefetch = 0 : i64, scratch_operands = 0 : i64, tpu.core_type = #tpu.core_type<tc>, window_params = [{transform_indices = @transform_0, window_bounds = array<i64: 8, 18>}, {pipeline_mode = #tpu.pipeline_mode<synchronous>, transform_indices = @transform_1, window_bounds = array<i64: 18, 256>}, {transform_indices = @transform_2, window_bounds = array<i64: 8, 128>}]} {
    %c0 = arith.constant 0 : index
    %c0_0 = arith.constant 0 : index
    %0 = vector.load %arg1[%c0, %c0_0] : memref<8x18xf32, #tpu.memory_space<vmem>>, vector<8x18xf32>
    %c0_1 = arith.constant 0 : index
    %c0_2 = arith.constant 0 : index
    %1 = vector.load %arg2[%c0_1, %c0_2] : memref<18x256xf32, #tpu.memory_space<vmem>>, vector<18x256xf32>
    %cst = arith.constant dense<0.000000e+00> : vector<8x256xf32>
    %2 = tpu.matmul %0, %1, %cst {dimension_numbers = #tpu.dot_dimension_numbers<[1], [0], [0], [1], [0, 0, 1, 1], [], []>} : vector<8x18xf32>, vector<18x256xf32>, vector<8x256xf32> -> vector<8x256xf32>
    %3 = vector.extract_strided_slice %2 {offsets = [0, 0], sizes = [8, 128], strides = [1, 1]} : vector<8x256xf32> to vector<8x128xf32>
    %4 = math.sin %3 : vector<8x128xf32>
    %5 = vector.extract_strided_slice %2 {offsets = [0, 128], sizes = [8, 128], strides = [1, 1]} : vector<8x256xf32> to vector<8x128xf32>
    %6 = math.exp %5 : vector<8x128xf32>
    %7 = arith.mulf %4, %6 : vector<8x128xf32>
    %c0_3 = arith.constant 0 : index
    %c0_4 = arith.constant 0 : index
    %8 = vector.load %arg3[%c0_3, %c0_4] : memref<8x128xf32, #tpu.memory_space<vmem>>, vector<8x128xf32>
    tpu.vector_store %arg3[%c0_3, %c0_4], %7 {strides = array<i32>} : memref<8x128xf32, #tpu.memory_space<vmem>>, vector<8x128xf32>,
    return
  }
  func.func @transform_0(%arg0: i32) -> (i32, i32) {
    %c0_i32 = arith.constant 0 : i32
    %c0_i32_0 = arith.constant 0 : i32
    return %arg0, %c0_i32 : i32, i32
  }
  func.func @transform_1(%arg0: i32) -> (i32, i32) {
    %c0_i32 = arith.constant 0 : i32
    %c0_i32_0 = arith.constant 0 : i32
    %c0_i32_1 = arith.constant 0 : i32
    return %c0_i32, %c0_i32_0 : i32, i32
  }
  func.func @transform_2(%arg0: i32) -> (i32, i32) {
    %c0_i32 = arith.constant 0 : i32
    %c0_i32_0 = arith.constant 0 : i32
    return %arg0, %c0_i32 : i32, i32
  }
}

</mosaic_0001>

<llo_original>
// kernel: gabor_layer.1
$region0: #{gabor_layer.1}
  #allocation0 [shape = 'u32[]', space=smem, size = 0x4, offset = 0x4, fixed_abs, tag = 'smem constant byte address 0x4 - core index']
  #allocation1 [shape = 'u32[144,128]{1,0:T(1,128)}', space=vmem, size = 0x12000, scoped, tag = 'internal scratch']
  %s0 = inlined_call_operand.vmem [shape: f32[16,18], index: 0, kind: input, shape index: {}]
  %s1 = inlined_call_operand.vmem [shape: f32[18,256], index: 1, kind: input, shape index: {}]
  %s2 = inlined_call_operand.vmem [shape: f32[16,128], index: 2, kind: output, shape index: {}]
  %s3 = sld [smem:[#allocation0]]
  $region41: #{gabor_layer.1} parent=0
    _
  %s5 = ssub.s32 1, %s3
  %s6 = scalar_select 0, %s5, %s3
  loop: start=0, step=1, limit=4
  $region2: #{gabor_layer.1} parent=0 // loop_pre_header
    _
  $region3: #{gabor_layer.1} parent=0 // loop_header
    %s8 = sphi 0, %s12
    %p9 = scmp.ge.s32.totalorder %s8, 4
    %s18 = sphi 0, %s20
    %s21 = sphi 0, %s18
    %s22 = sphi 0, %s21
    %s38 = sphi 0, %s22
    %s42 = sphi 0, %s42
    %s44 = sphi 0, %s42
    %s45 = sphi 0, %s44
    %s59 = sphi 0, %s45
    %s65 = sphi 0, %s67
    %s68 = sphi 0, %s65
    %s69 = sphi 0, %s68
    %s85 = sphi 0, %s69
  $region4: #{gabor_layer.1} parent=0 // loop_header_branch
    %11 = sbr.rel (%p9) target = $region8
  $region5: #{gabor_layer.1} parent=0 // loop_body
    %s13 = ssub.s32 %s8, 1
    %s14 = ssub.s32 %s8, 2
    %s15 = sadd.s32 %s8, 1
    %s16 = ssub.s32 %s8, %s15
    %p17 = scmp.eq.s32.totalorder %s16, 0
    %s19 = sadd.s32 %s18, 1
    %s20 = scalar_select %p17, %s18, %s19
    %p23 = pneg %p17
    %p24 = scmp.eq.s32.totalorder %s8, 1
    %p25 = por %p23, %p24
    %p26 = scmp.ne.s32.totalorder %s18, %s21
    %p27 = scmp.eq.s32.totalorder %s8, 0
    %p28 = por %p26, %p27
    %p29 = scmp.ne.s32.totalorder %s18, %s21
    %p30 = scmp.eq.s32.totalorder %s13, 1
    %p31 = por %p29, %p30
    %p32 = scmp.ne.s32.totalorder %s21, %s22
    %p33 = scmp.eq.s32.totalorder %s13, 0
    %p34 = por %p32, %p33
    %p35 = scmp.ne.s32.totalorder %s21, %s22
    %p36 = scmp.eq.s32.totalorder %s14, 1
    %p37 = por %p35, %p36
    %p39 = scmp.ne.s32.totalorder %s22, %s38
    %p40 = scmp.eq.s32.totalorder %s14, 0
    %p41 = por %p39, %p40
    %s43 = sadd.s32 %s42, 1
    %p46 = scmp.eq.s32.totalorder %s8, 1
    %p47 = scmp.ne.s32.totalorder %s42, %s44
    %p48 = scmp.eq.s32.totalorder %s8, 0
    %p49 = por %p47, %p48
    %p50 = scmp.ne.s32.totalorder %s42, %s44
    %p51 = scmp.eq.s32.totalorder %s13, 1
    %p52 = por %p50, %p51
    %p53 = scmp.ne.s32.totalorder %s44, %s45
    %p54 = scmp.eq.s32.totalorder %s13, 0
    %p55 = por %p53, %p54
    %p56 = scmp.ne.s32.totalorder %s44, %s45
    %p57 = scmp.eq.s32.totalorder %s14, 1
    %p58 = por %p56, %p57
    %p60 = scmp.ne.s32.totalorder %s45, %s59
    %p61 = scmp.eq.s32.totalorder %s14, 0
    %p62 = por %p60, %p61
    %s63 = ssub.s32 %s8, %s15
    %p64 = scmp.eq.s32.totalorder %s63, 0
    %s66 = sadd.s32 %s65, 1
    %s67 = scalar_select %p64, %s65, %s66
    %p70 = pneg %p64
    %p71 = scmp.eq.s32.totalorder %s8, 1
    %p72 = por %p70, %p71
    %p73 = scmp.ne.s32.totalorder %s65, %s68
    %p74 = scmp.eq.s32.totalorder %s8, 0
    %p75 = por %p73, %p74
    %p76 = scmp.ne.s32.totalorder %s65, %s68
    %p77 = scmp.eq.s32.totalorder %s13, 1
    %p78 = por %p76, %p77
    %p79 = scmp.ne.s32.totalorder %s68, %s69
    %p80 = scmp.eq.s32.totalorder %s13, 0
    %p81 = por %p79, %p80
    %p82 = scmp.ne.s32.totalorder %s68, %s69
    %p83 = scmp.eq.s32.totalorder %s14, 1
    %p84 = por %p82, %p83
    %p86 = scmp.ne.s32.totalorder %s69, %s85
    %p87 = scmp.eq.s32.totalorder %s14, 0
    %p88 = por %p86, %p87
    %p89 = scmp.le.s32.totalorder 1, %s8
    %p90 = scmp.lt.s32.totalorder %s8, 3
    %p91 = pnand %p89, %p90
    %p92 = pneg %p91
    // Predicated region
    $region9: #{gabor_layer.1} parent=5 // pred_check
      _
    $region10: #{gabor_layer.1} parent=5 // pred_check_branch
      %94 = sbr.rel (%p91) target = $region12
    $region11: #{gabor_layer.1} parent=5 // pred_region
      %s95 = ssub.s32 %s8, 1
      // Predicated region
      $region13: #{gabor_layer.1} parent=11 // pred_check
        %p96 = pneg %p55
      $region14: #{gabor_layer.1} parent=11 // pred_check_branch
        %98 = sbr.rel (%p96) target = $region16
      $region15: #{gabor_layer.1} parent=11 // pred_region
        _
      $region16: #{gabor_layer.1} parent=11 // pred_fallthru
        _
    $region12: #{gabor_layer.1} parent=5 // pred_fallthru
      _
    %p99 = scmp.lt.s32.totalorder %s8, 2
    // Predicated region
    $region17: #{gabor_layer.1} parent=5 // pred_check
      %p100 = pneg %p99
    $region18: #{gabor_layer.1} parent=5 // pred_check_branch
      %102 = sbr.rel (%p100) target = $region20
    $region19: #{gabor_layer.1} parent=5 // pred_region
      // Predicated region
      $region21: #{gabor_layer.1} parent=19 // pred_check
        %p103 = pneg %p28
      $region22: #{gabor_layer.1} parent=19 // pred_check_branch
        %105 = sbr.rel (%p103) target = $region24
      $region23: #{gabor_layer.1} parent=19 // pred_region
        %p106 = scmp.lt.s32.totalorder %s8, 1
        %s107 = scalar_select %p106, %s8, 1
        %s108 = smul.addr %s107, 8
        %s109 = scalar_lea.vmem %s0, %s108
      $region24: #{gabor_layer.1} parent=19 // pred_fallthru
        _
    $region20: #{gabor_layer.1} parent=5 // pred_fallthru
      _
    %p110 = scmp.le.s32.totalorder 1, %s8
    %p111 = scmp.lt.s32.totalorder %s8, 3
    %p112 = pnand %p110, %p111
    %p113 = pneg %p112
    // Predicated region
    $region25: #{gabor_layer.1} parent=5 // pred_check
      _
    $region26: #{gabor_layer.1} parent=5 // pred_check_branch
      %115 = sbr.rel (%p112) target = $region28
    $region27: #{gabor_layer.1} parent=5 // pred_region
      %s116 = ssub.s32 %s8, 1
      %p117 = scmp.lt.s32.totalorder %s13, 1
      %s118 = scalar_select %p117, %s13, 1
      %s119 = smul.addr %s118, 8
      %s120 = scalar_lea.vmem %s0, %s119
      %p121 = pneg %p34
      %p122 = pneg %p31
      %p123 = pneg %p55
      %p124 = pneg %p52
      %p125 = pneg %p81
      %p126 = pneg %p78
      %p127 = scmp.lt.s32.totalorder %s13, 1
      %s128 = scalar_select %p127, %s13, 1
      %s129 = smul.addr %s128, 8
      %s130 = scalar_lea.vmem %s2, %s129
      %p131 = scmp.lt.s32.totalorder %s13, 1
      %s132 = scalar_select %p131, %s13, 1
      %s133 = smul.addr %s132, 8
      %s134 = scalar_lea.vmem %s0, %s133
      %p135 = scmp.lt.s32.totalorder %s13, 1
      %s136 = scalar_select %p135, %s13, 1
      %s137 = smul.addr %s136, 8
      %s138 = scalar_lea.vmem %s2, %s137
      %v139 = vld [vmem:[%s134] sm:$0xff]
      %v140 = vld [vmem:[%s1] sm:$0xff]
      %v141 = vld [vmem:[%s1 + $0x8] sm:$0xff]
      %v142 = vld [vmem:[%s1 + $0x10] sm:$0xff]
      %v143 = vld [vmem:[%s1 + $0x18] sm:$0xff]
      %v144 = vld [vmem:[%s1 + $0x20] sm:$0x3]
      %v145 = vld [vmem:[%s1 + $0x28] sm:$0x3]
      %vm146 = vcmask 146432
      %v148 = vsel %vm146, %v139, 0
      %vm150 = vcmask 1041408
      %v152 = vsel %vm150, %v144, 0
      %v155 = vsel %vm150, %v145, 0
      %157 = vmatprep.subr.mxu0 0.0
      %158 = vmatpush1.msra.mxu0 0.0
      %159 = vmatprep.subr.mxu0 0.0
      %160 = vmatpush1.msra.mxu0 0.0
      %161 = vmatprep.subr.mxu0 0.0
      %162 = vmatpush1.msra.mxu0 0.0
      %163 = vmatprep.subr.mxu0 0.0
      %164 = vmatpush1.msra.mxu0 0.0
      %165 = vmatprep.subr.mxu0 0.0
      %166 = vmatpush1.msra.mxu0 0.0
      %167 = vmatprep.subr.mxu0 0.0
      %168 = vmatpush1.msra.mxu0 0.0
      %169 = vmatprep.subr.mxu0 0.0
      %170 = vmatpush1.msra.mxu0 0.0
      %171 = vmatprep.subr.mxu0 0.0
      %172 = vmatpush1.msra.mxu0 0.0
      %173 = vmatprep.subr.mxu0 0.0
      %174 = vmatpush1.msra.mxu0 0.0
      %175 = vmatprep.subr.mxu0 0.0
      %176 = vmatpush1.msra.mxu0 0.0
      %177 = vmatprep.subr.mxu0 0.0
      %178 = vmatpush1.msra.mxu0 0.0
      %179 = vmatprep.subr.mxu0 0.0
      %180 = vmatpush1.msra.mxu0 0.0
      %181 = vmatprep.subr.mxu0 0.0
      %182 = vmatpush1.msra.mxu0 0.0
      %183 = vmatprep.subr.mxu0 %v155
      %184 = vmatpush1.msra.mxu0 %v152
      %185 = vmatprep.subr.mxu0 %v143
      %186 = vmatpush1.msra.mxu0 %v142
      %187 = vmatprep.subr.mxu0 %v141
      %188 = vmatpush1.msra.mxu0 %v140
      %189 = vmatprep.subr.mxu0 0.0
      %190 = vmatpush2.msra.mxu0 0.0
      %191 = vmatprep.subr.mxu0 0.0
      %192 = vmatpush2.msra.mxu0 0.0
      %193 = vmatprep.subr.mxu0 0.0
      %194 = vmatpush2.msra.mxu0 0.0
      %195 = vmatprep.subr.mxu0 0.0
      %196 = vmatpush2.msra.mxu0 0.0
      %197 = vmatprep.subr.mxu0 0.0
      %198 = vmatpush2.msra.mxu0 0.0
      %199 = vmatprep.subr.mxu0 0.0
      %200 = vmatpush2.msra.mxu0 0.0
      %201 = vmatprep.subr.mxu0 0.0
      %202 = vmatpush2.msra.mxu0 0.0
      %203 = vmatprep.subr.mxu0 0.0
      %204 = vmatpush2.msra.mxu0 0.0
      %205 = vmatprep.subr.mxu0 0.0
      %206 = vmatpush2.msra.mxu0 0.0
      %207 = vmatprep.subr.mxu0 0.0
      %208 = vmatpush2.msra.mxu0 0.0
      %209 = vmatprep.subr.mxu0 0.0
      %210 = vmatpush2.msra.mxu0 0.0
      %211 = vmatprep.subr.mxu0 0.0
      %212 = vmatpush2.msra.mxu0 0.0
      %213 = vmatprep.subr.mxu0 0.0
      %214 = vmatpush2.msra.mxu0 0.0
      %215 = vmatprep.subr.mxu0 0.0
      %216 = vmatpush2.msra.mxu0 0.0
      %217 = vmatprep.subr.mxu0 0.0
      %218 = vmatpush2.msra.mxu0 0.0
      %219 = vmatprep.subr.mxu0 0.0
      %220 = vmatpush2.msra.mxu0 0.0
      %221 = vmatprep.mubr.f32.mxu0 0.0
      %222 = vmatmul.mubr.f32.gmra.mxu0 %v148
      %v223 = vpop.f32.mrf.mxu0
      %v224 = vadd.f32 0.0, %v223
      %v225 = vpop.f32.mrf.mxu0
      %v226 = vadd.f32 0.0, %v225
      %227 = vdwg.mxu0
      %v228 = vand.u32 2147483647, %v224
      %vm229 = vcmp.le.f32.partialorder %v228, 0.7853982
      %vm230 = vcmp.lt.s32.totalorder %v224, 0
      %v231 = vand.u32 %v224, 2139095040
      %v232 = vshrl.u32 %v231, 23
      %v233 = vsub.s32 %v232, 127
      %v234 = vand.u32 2147483647, %v224
      %v235 = vand.u32 %v234, 8388607
      %v236 = vor.u32 %v235, 8388608
      %v237 = vsub.s32 0, %v236
      %v238 = vadd.s32 %v233, 1
      %vm239 = vcmp.gt.s32.totalorder %v238, 0
      %v240 = vsel %vm239, %v238, 0
      %v241 = vshrl.u32 %v240, 5
      %v242 = vand.u32 %v240, 31
      %v243 = vsub.s32 32, %v242
      %v244 = vshrl.u32 683565275, %v243
      %v245 = vshll.u32 683565275, %v242
      %v246 = vshrl.u32 2475754826, %v243
      %v247 = vor.u32 %v245, %v246
      %v248 = vshll.u32 2475754826, %v242
      %v249 = vshrl.u32 2131351028, %v243
      %v250 = vor.u32 %v248, %v249
      %v251 = vshll.u32 2131351028, %v242
      %v252 = vshrl.u32 2102212464, %v243
      %v253 = vor.u32 %v251, %v252
      %v254 = vshll.u32 2102212464, %v242
      %v255 = vshrl.u32 920167782, %v243
      %v256 = vor.u32 %v254, %v255
      %v257 = vshll.u32 920167782, %v242
      %v258 = vshrl.u32 1326507024, %v243
      %v259 = vor.u32 %v257, %v258
      %vm260 = vcmp.lt.s32.totalorder %v241, 1
      %vm261 = vcmp.lt.s32.totalorder %v241, 2
      %vm262 = vcmp.lt.s32.totalorder %v241, 3
      %vm263 = vcmp.lt.s32.totalorder %v241, 4
      %v264 = vsel %vm260, %v244, %v247
      %v265 = vsel %vm263, %v253, 2102212464
      %v266 = vsel %vm262, %v250, %v265
      %v267 = vsel %vm261, %v264, %v266
      %v268 = vsel %vm260, %v247, %v250
      %v269 = vsel %vm263, %v256, 920167782
      %v270 = vsel %vm262, %v253, %v269
      %v271 = vsel %vm261, %v268, %v270
      %v272 = vsel %vm260, %v250, %v253
      %v273 = vsel %vm263, %v259, 1326507024
      %v274 = vsel %vm262, %v256, %v273
      %v275 = vsel %vm261, %v272, %v274
      %v276 = vshll.u32 %v236, 8
      %v277 = vmul.u32.u64.compose %v276, %v275
      %v278 = vextract.low.u32 %v277
      %v279 = vextract.high.u32 %v277
      %v280 = vmul.u32.u64.compose %v276, %v271
      %v281 = vextract.low.u32 %v280
      %v282 = vextract.high.u32 %v280
      %v283 = vmul.u32 %v276, %v267
      %v284 = vadd.s32 %v279, %v281
      %vm285 = vc.u32 %v279, %v281
      %v286 = vadd.s32 %v282, 1
      %v287 = vsel %vm285, %v286, %v282
      %v288 = vadd.s32 %v283, %v287
      %v289 = vadd.s32 %v288, 536870912
      %v290 = vshrl.u32 %v289, 30
      %v291 = vshll.u32 %v290, 30
      %v292 = vsub.s32 %v288, %v291
      %vm293 = vcmp.lt.s32.totalorder %v292, 0
      %v294 = vsub.s32 0, %v292
      %v295 = vsel %vm293, %v294, %v292
      %v296 = vclz %v295
      %v297 = vsub.s32 %v296, 2
      %vm298 = vcmp.gt.s32.totalorder 0, %v297
      %v299 = vsel %vm298, 0, %v297
      %v300 = vsub.s32 32, %v299
      %v301 = vshll.u32 %v292, %v299
      %v302 = vshrl.u32 %v284, %v300
      %v303 = vor.u32 %v301, %v302
      %v304 = vsub.s32 4294967266, %v299
      %v305 = vadd.s32 %v304, 127
      %v306 = vshll.u32 %v305, 23
      %v307 = vor.u32 4788187, %v306
      %v308 = vand.u32 2147483647, %v307
      %v310 = vcvt.s32.f32 %v303
      %v311 = vmul.f32 %v310, %v308
      %v312 = vxor.u32 %v311, 2147483648
      %v313 = vsel %vm230, %v312, %v311
      %v314 = vsub.s32 4, %v290
      %v315 = vsel %vm230, %v314, %v290
      %v316 = vsel %vm229, %v224, %v313
      %v317 = vsel %vm229, 0, %v315
      %v318 = vcosq.f32.pop %v316
      %v319 = vsinq.f32.pop %v316
      %vm320 = vweird.f32 %v224
      %v321 = vadd.s32 %v317, 3
      %v322 = vand.u32 %v321, 3
      %vm323 = vcmp.lt.s32.totalorder %v322, 2
      %vm324 = vcmp.eq.s32.totalorder %v322, 0
      %v325 = vxor.u32 %v319, 2147483648
      %v326 = vsel %vm324, %v318, %v325
      %vm327 = vcmp.eq.s32.totalorder %v322, 2
      %v328 = vxor.u32 %v318, 2147483648
      %v329 = vsel %vm327, %v328, %v319
      %v330 = vsel %vm323, %v326, %v329
      %v331 = vsel %vm320, nan, %v330
      %v332 = vmul.f32 %v226, 1.442695
      %v333 = vpow.pop %v332
      %v334 = vmul.f32 %v331, %v333
      %335 = vst [vmem:[%s138] sm:$0xff] %v334
      %p336 = scmp.lt.s32.totalorder %s13, 1
      %s337 = scalar_select %p336, %s13, 1
      %s338 = smul.addr %s337, 8
      %s339 = scalar_lea.vmem %s2, %s338
      // Predicated region
      $region29: #{gabor_layer.1} parent=27 // pred_check
        %p340 = pneg %p78
      $region30: #{gabor_layer.1} parent=27 // pred_check_branch
        %342 = sbr.rel (%p340) target = $region32
      $region31: #{gabor_layer.1} parent=27 // pred_region
        _
      $region32: #{gabor_layer.1} parent=27 // pred_fallthru
        _
    $region28: #{gabor_layer.1} parent=5 // pred_fallthru
      _
    %p343 = scmp.le.s32.totalorder 2, %s8
    // Predicated region
    $region33: #{gabor_layer.1} parent=5 // pred_check
      %p344 = pneg %p343
    $region34: #{gabor_layer.1} parent=5 // pred_check_branch
      %346 = sbr.rel (%p344) target = $region36
    $region35: #{gabor_layer.1} parent=5 // pred_region
      %s347 = ssub.s32 %s8, 2
      // Predicated region
      $region37: #{gabor_layer.1} parent=35 // pred_check
        %p348 = pneg %p84
      $region38: #{gabor_layer.1} parent=35 // pred_check_branch
        %350 = sbr.rel (%p348) target = $region40
      $region39: #{gabor_layer.1} parent=35 // pred_region
        %p351 = scmp.lt.s32.totalorder %s14, 1
        %s352 = scalar_select %p351, %s14, 1
        %s353 = smul.addr %s352, 8
        %s354 = scalar_lea.vmem %s2, %s353
      $region40: #{gabor_layer.1} parent=35 // pred_fallthru
        _
    $region36: #{gabor_layer.1} parent=5 // pred_fallthru
      _
  $region6: #{gabor_layer.1} parent=0 // loop_footer
    %s12 = sadd.s32 1, %s8
  $region7: #{gabor_layer.1} parent=0 // loop_footer_branch
    %7 = sbr.rel target = $region3
  $region8: #{gabor_layer.1} parent=0 // loop_exit
    _

</llo_original>
